<compile_context>
chip_gen: v5e
topology: v5e:2x2
jax: 0.10.0
libtpu: 0.0.40
codegen_flags: <defaults>
</compile_context>

<pallas_src>
import jax
import jax.numpy as jnp
from jax.experimental import pallas as pl
from jax.experimental.pallas import tpu as pltpu


def _round_up(x, m):
    return ((x + m - 1) // m) * m


def _gelu_tanh(x):
    # TODO(synk): TRT-LLM ACT2FN['gelu'] is the erf variant; the tanh
    # approximation is used since it lowers cleanly in Mosaic (<~1e-3 rel diff).
    c = 0.7978845608028654  # sqrt(2/pi)
    return 0.5 * x * (1.0 + jnp.tanh(c * (x + 0.044715 * x * x * x)))


# ----------------------------------------------------------------------------
# Kernel
# ----------------------------------------------------------------------------
def _caption_embedder_kernel(
    drop_ref,   # SMEM (B,) int32        -- scalar-prefetched drop flags
    cap_ref,    # VMEM (Bb, Tp, C)       -- caption tile, original HBM dtype
    yemb_ref,   # VMEM (Tp, C)  bf16     -- unconditional embedding (invariant)
    w1_ref,     # VMEM (C, Hp)  bf16     -- fc1 weight (invariant)
    b1_ref,     # VMEM (1, Hp)  f32      -- fc1 bias   (invariant)
    w2_ref,     # VMEM (Hp, Hp) bf16     -- fc2 weight (invariant)
    b2_ref,     # VMEM (1, Hp)  f32      -- fc2 bias   (invariant)
    out_ref,    # VMEM (Bb, Tp, Hp)
    x_ref,      # VMEM scratch (Bb*Tp, C) bf16
):
    Bb, Tp, C = cap_ref.shape
    Hp = w1_ref.shape[1]
    step = pl.program_id(0)
    cdt = yemb_ref.dtype

    yemb = yemb_ref[...]
    # token_drop: per-batch-row select between caption and the unconditional
    # embedding.  Drop flags are scalars read from SMEM, so each row is a
    # scalar-predicate select.  The caption -> bf16 cast happens here (VPU,
    # hidden under the MXU) rather than as a separate XLA pass in the wrapper.
    for b in range(Bb):
        dropped = drop_ref[step * Bb + b] != 0
        x_ref[b * Tp:(b + 1) * Tp, :] = jnp.where(
            dropped, yemb, cap_ref[b].astype(cdt))

    # fc1 + GELU: bf16 MXU matmul, f32 accumulation, f32 activation math.
    h = jnp.dot(x_ref[...], w1_ref[...], preferred_element_type=jnp.float32)
    h = _gelu_tanh(h + b1_ref[...])

    # fc2 (activations cast back to bf16 to feed the MXU).
    o = jnp.dot(h.astype(cdt), w2_ref[...], preferred_element_type=jnp.float32)
    o = o + b2_ref[...]

    out_ref[...] = o.reshape(Bb, Tp, Hp).astype(out_ref.dtype)


# ----------------------------------------------------------------------------
# Hardware / capability helpers
# ----------------------------------------------------------------------------
def _vmem_capacity_bytes():
    try:
        return int(pltpu.get_tpu_info().vmem_capacity_bytes)
    except Exception:
        return 64 << 20  # conservative (v7x-sized) fallback


def _num_tensorcores_per_chip():
    try:
        kind = jax.devices()[0].device_kind.lower()
        if "v7" in kind or "7x" in kind:
            return 2
    except Exception:
        pass
    return 1


_SINGLE_BUFFER_SUPPORTED = None


def _single_buffer_supported():
    """One-time cached check that pipeline_mode=pl.Buffered(1) compiles."""
    global _SINGLE_BUFFER_SUPPORTED
    if _SINGLE_BUFFER_SUPPORTED is not None:
        return _SINGLE_BUFFER_SUPPORTED
    try:
        def _k(x_ref, o_ref):
            o_ref[...] = x_ref[...] + 1.0

        probe = pl.pallas_call(
            _k,
            out_shape=jax.ShapeDtypeStruct((8, 128), jnp.float32),
            grid=(2,),
            in_specs=[pl.BlockSpec((8, 128), lambda i: (0, 0),
                                   pipeline_mode=pl.Buffered(1))],
            out_specs=pl.BlockSpec((8, 128), lambda i: (0, 0)),
            compiler_params=pltpu.CompilerParams(
                dimension_semantics=("arbitrary",)),
        )
        jax.jit(probe).lower(
            jax.ShapeDtypeStruct((8, 128), jnp.float32)).compile()
        _SINGLE_BUFFER_SUPPORTED = True
    except Exception:
        _SINGLE_BUFFER_SUPPORTED = False
    return _SINGLE_BUFFER_SUPPORTED


# ----------------------------------------------------------------------------
# Parameter preparation (run ONCE at init, not per forward call)
# ----------------------------------------------------------------------------
def prepare_caption_embedder_params(y_embedding, w1, b1, w2, b2,
                                    *, compute_dtype=jnp.bfloat16):
    """Pad the hidden dim to a multiple of 128 (lane-dense stores), pad the
    token dim to a multiple of 8 (sublane-aligned batch packing) and cast the
    grid-invariant operands to the compute dtype, once."""
    T, C = y_embedding.shape
    H = w1.shape[1]
    Hp = _round_up(H, 128)
    Tp = _round_up(T, 8)

    if Hp != H:
        w1 = jnp.pad(w1, ((0, 0), (0, Hp - H)))
        b1 = jnp.pad(b1, ((0, Hp - H),))
        w2 = jnp.pad(w2, ((0, Hp - H), (0, Hp - H)))
        b2 = jnp.pad(b2, ((0, Hp - H),))
    if Tp != T:
        y_embedding = jnp.pad(y_embedding, ((0, Tp - T), (0, 0)))

    return {
        "yemb": y_embedding.astype(compute_dtype),     # (Tp, C)
        "w1": w1.astype(compute_dtype),                # (C, Hp)
        "b1": b1.reshape(1, Hp).astype(jnp.float32),   # (1, Hp)
        "w2": w2.astype(compute_dtype),                # (Hp, Hp)
        "b2": b2.reshape(1, Hp).astype(jnp.float32),   # (1, Hp)
        "T": T, "Tp": Tp, "C": C, "H": H, "Hp": Hp,
        "compute_dtype": compute_dtype,
    }


def _pick_batch_tile(B, Tp, C, Hp, cap_isz, out_isz, inv_bytes, vmem_cap,
                     single_buffer, row_target=512):
    """Largest batch tile that (a) keeps grid >= 2 steps (>= 4 on v7x so both
    TensorCores engage), (b) fits the VMEM budget, preferring the smallest
    tile that already reaches ~512 MXU rows per step."""
    min_grid = min(2 * _num_tensorcores_per_chip(), B)
    inv_mult = 1 if single_buffer else 2

    def fits(d):
        stream = 2 * d * Tp * (C * cap_isz + Hp * out_isz)   # double-buffered blocks
        scratch = d * Tp * C * 2                             # x scratch (bf16)
        interm = d * Tp * (C * 2 + Hp * 12)                  # casts + h/o intermediates
        return inv_mult * inv_bytes + stream + scratch + interm + (4 << 20) <= vmem_cap

    divs = [d for d in range(1, B + 1)
            if B % d == 0 and (B // d) >= min_grid and fits(d)]
    if not divs:
        return 1
    for d in sorted(divs):
        if d * Tp >= row_target:
            return d
    return max(divs)


# ----------------------------------------------------------------------------
# Forward wrapper
# ----------------------------------------------------------------------------
def caption_embedder(caption, drop_ids, params, *, batch_tile=None,
                     out_dtype=None):
    """caption: [B, 1, T, C], drop_ids: [B] int -> [B, 1, T, H]."""
    B, one, T, C = caption.shape
    assert one == 1
    assert T == params["T"] and C == params["C"]
    Tp, H, Hp = params["Tp"], params["H"], params["Hp"]
    cdt = params["compute_dtype"]
    out_dtype = caption.dtype if out_dtype is None else out_dtype

    if Tp != T:
        # TODO(synk): extra HBM pass only when token_num % 8 != 0 (rare).
        caption = jnp.pad(caption, ((0, 0), (0, 0), (0, Tp - T), (0, 0)))

    drop_ids = drop_ids.astype(jnp.int32).reshape(B)

    cap_isz = jnp.dtype(caption.dtype).itemsize
    out_isz = jnp.dtype(out_dtype).itemsize
    cdt_isz = jnp.dtype(cdt).itemsize
    inv_bytes = ((params["yemb"].size + params["w1"].size + params["w2"].size)
                 * cdt_isz + (params["b1"].size + params["b2"].size) * 4)

    vmem_cap = int(0.78 * _vmem_capacity_bytes())
    single_buffer = _single_buffer_supported()

    if batch_tile is None:
        Bb = _pick_batch_tile(B, Tp, C, Hp, cap_isz, out_isz, inv_bytes,
                              vmem_cap, single_buffer)
    else:
        Bb = batch_tile
    assert B % Bb == 0, "batch_tile must divide the batch size"
    grid = (B // Bb,)

    inv_mult = 1 if single_buffer else 2
    stream_bytes = 2 * Bb * Tp * (C * cap_isz + Hp * out_isz)
    interm_bytes = Bb * Tp * (2 * C * cdt_isz + Hp * 12)
    vmem_limit = int(min(vmem_cap,
                         max(inv_mult * inv_bytes + stream_bytes
                             + interm_bytes + (4 << 20), 32 << 20)))
    # TODO(synk): for very large C (e.g. 4096) on v7x (64 MiB VMEM), add a K
    # grid axis over C for fc1 with an f32 VMEM accumulator instead of keeping
    # all of W1 resident.

    def _const_spec(shape):
        n = len(shape)
        idx = lambda i, drop, _n=n: (0,) * _n
        if single_buffer:
            return pl.BlockSpec(shape, idx, pipeline_mode=pl.Buffered(1))
        return pl.BlockSpec(shape, idx)

    fn = pl.pallas_call(
        _caption_embedder_kernel,
        out_shape=jax.ShapeDtypeStruct((B, 1, Tp, Hp), out_dtype),
        grid_spec=pltpu.PrefetchScalarGridSpec(
            num_scalar_prefetch=1,
            grid=grid,
            in_specs=[
                pl.BlockSpec((Bb, None, Tp, C), lambda i, drop: (i, 0, 0, 0)),
                _const_spec((Tp, C)),    # y_embedding
                _const_spec((C, Hp)),    # w1
                _const_spec((1, Hp)),    # b1
                _const_spec((Hp, Hp)),   # w2
                _const_spec((1, Hp)),    # b2
            ],
            out_specs=pl.BlockSpec((Bb, None, Tp, Hp),
                                   lambda i, drop: (i, 0, 0, 0)),
            scratch_shapes=[pltpu.VMEM((Bb * Tp, C), cdt)],
        ),
        compiler_params=pltpu.CompilerParams(
            dimension_semantics=("parallel",),
            vmem_limit_bytes=vmem_limit),
    )
    out = fn(drop_ids, caption, params["yemb"], params["w1"], params["b1"],
             params["w2"], params["b2"])

    if Hp != H or Tp != T:
        out = out[:, :, :T, :H]
    return out


# ----------------------------------------------------------------------------
# Plain-JAX reference (replicates the kernel's bf16-in / f32-accumulate math)
# ----------------------------------------------------------------------------
def caption_embedder_ref(caption, drop_ids, y_embedding, w1, b1, w2, b2,
                         compute_dtype=jnp.bfloat16, out_dtype=None):
    f32 = jnp.float32
    out_dtype = caption.dtype if out_dtype is None else out_dtype
    drop = (drop_ids != 0)[:, None, None, None]
    x = jnp.where(drop,
                  y_embedding[None, None].astype(compute_dtype),
                  caption.astype(compute_dtype)).astype(f32)
    h = jnp.einsum("bltc,ch->blth", x, w1.astype(compute_dtype).astype(f32))
    h = _gelu_tanh(h + b1.astype(f32))
    h = h.astype(compute_dtype).astype(f32)
    o = jnp.einsum("blth,hk->bltk", h, w2.astype(compute_dtype).astype(f32))
    o = o + b2.astype(f32)
    return o.astype(out_dtype)


if __name__ == "__main__":
    # Small shapes consistent with the module: in_channels=C, hidden_size=H,
    # token_num=T, batch=B.  H=96 exercises the pad-to-128 lane-dense path.
    B, T, C, H = 4, 16, 128, 96
    dtype = jnp.float32

    key = jax.random.PRNGKey(0)
    k_cap, k_emb, k_w1, k_b1, k_w2, k_b2 = jax.random.split(key, 6)

    caption = jax.random.normal(k_cap, (B, 1, T, C), dtype)
    # y_embedding = randn(token_num, in_channels) / sqrt(in_channels)
    y_embedding = jax.random.normal(k_emb, (T, C), dtype) / (C ** 0.5)

    # CaptionMLP params (fc1: C->H, fc2: H->H), deterministic init.
    w1 = jax.random.normal(k_w1, (C, H), dtype) * (1.0 / (C ** 0.5))
    b1 = jax.random.normal(k_b1, (H,), dtype) * 0.01
    w2 = jax.random.normal(k_w2, (H, H), dtype) * (1.0 / (H ** 0.5))
    b2 = jax.random.normal(k_b2, (H,), dtype) * 0.01

    # force_drop_ids: static, deterministic mix of kept / dropped batches.
    drop_ids = jnp.array([0, 1, 1, 0], dtype=jnp.int32)

    # One-time weight preparation (pad + cast), as at model init.
    params = prepare_caption_embedder_params(y_embedding, w1, b1, w2, b2)

    ref = caption_embedder_ref(caption, drop_ids, y_embedding, w1, b1, w2, b2)

    # Default heuristic batch packing (grid >= 2 steps here).
    out = caption_embedder(caption, drop_ids, params)
    out = jax.block_until_ready(out)
    assert out.shape == (B, 1, T, H)
    assert jnp.allclose(out, ref, atol=1e-2, rtol=1e-2)

    # Explicit 1-batch tiles -> grid of 4 parallel steps (exercises revisited
    # grid-invariant weight blocks and megacore sharding).
    out2 = jax.block_until_ready(
        caption_embedder(caption, drop_ids, params, batch_tile=1))
    assert jnp.allclose(out2, ref, atol=1e-2, rtol=1e-2)

    print("KERNEL_OK")
</pallas_src>

<mosaic_0001>
module attributes {stable_mosaic.version = 11 : i64} {
  func.func @_caption_embedder_kernel(%arg0: i32, %arg1: memref<4xi32, #tpu.memory_space<smem>>, %arg2: memref<2x1x16x128xf32, #tpu.memory_space<vmem>>, %arg3: memref<16x128xbf16, #tpu.memory_space<vmem>>, %arg4: memref<128x128xbf16, #tpu.memory_space<vmem>>, %arg5: memref<1x128xf32, #tpu.memory_space<vmem>>, %arg6: memref<128x128xbf16, #tpu.memory_space<vmem>>, %arg7: memref<1x128xf32, #tpu.memory_space<vmem>>, %arg8: memref<2x1x16x128xf32, #tpu.memory_space<vmem>>, %arg9: memref<32x128xbf16, #tpu.memory_space<vmem>>) attributes {dimension_semantics = [#tpu.dimension_semantics<parallel>], iteration_bounds = array<i64: 2>, scalar_prefetch = 1 : i64, scratch_operands = 1 : i64, tpu.core_type = #tpu.core_type<tc>, window_params = [{transform_indices = @transform_0, window_bounds = array<i64: 2, 1, 16, 128>}, {pipeline_mode = #tpu.pipeline_mode<synchronous>, transform_indices = @transform_1, window_bounds = array<i64: 16, 128>}, {pipeline_mode = #tpu.pipeline_mode<synchronous>, transform_indices = @transform_2, window_bounds = array<i64: 128, 128>}, {pipeline_mode = #tpu.pipeline_mode<synchronous>, transform_indices = @transform_3, window_bounds = array<i64: 1, 128>}, {pipeline_mode = #tpu.pipeline_mode<synchronous>, transform_indices = @transform_4, window_bounds = array<i64: 128, 128>}, {pipeline_mode = #tpu.pipeline_mode<synchronous>, transform_indices = @transform_5, window_bounds = array<i64: 1, 128>}, {transform_indices = @transform_6, window_bounds = array<i64: 2, 1, 16, 128>}]} {
    %c0 = arith.constant 0 : index
    %c0_0 = arith.constant 0 : index
    %0 = vector.load %arg3[%c0, %c0_0] : memref<16x128xbf16, #tpu.memory_space<vmem>>, vector<16x128xbf16>
    %c2_i32 = arith.constant 2 : i32
    %1 = arith.muli %arg0, %c2_i32 : i32
    %c0_i32 = arith.constant 0 : i32
    %2 = arith.addi %1, %c0_i32 : i32
    %3 = arith.index_cast %2 : i32 to index
    %4 = memref.load %arg1[%3] : memref<4xi32, #tpu.memory_space<smem>>
    %c0_i32_1 = arith.constant 0 : i32
    %5 = arith.cmpi ne, %4, %c0_i32_1 : i32
    %c0_2 = arith.constant 0 : index
    %c0_3 = arith.constant 0 : index
    %c0_4 = arith.constant 0 : index
    %c0_5 = arith.constant 0 : index
    %6 = vector.load %arg2[%c0_2, %c0_3, %c0_4, %c0_5] : memref<2x1x16x128xf32, #tpu.memory_space<vmem>>, vector<1x1x16x128xf32>
    %7 = vector.shape_cast %6 : vector<1x1x16x128xf32> to vector<16x128xf32>
    %8 = arith.truncf %7 : vector<16x128xf32> to vector<16x128xbf16>
    %9 = arith.select %5, %0, %8 : vector<16x128xbf16>
    %c0_6 = arith.constant 0 : index
    %c0_7 = arith.constant 0 : index
    %10 = vector.load %arg9[%c0_6, %c0_7] : memref<32x128xbf16, #tpu.memory_space<vmem>>, vector<16x128xbf16>
    tpu.vector_store %arg9[%c0_6, %c0_7], %9 {strides = array<i32>} : memref<32x128xbf16, #tpu.memory_space<vmem>>, vector<16x128xbf16>,
    %c2_i32_8 = arith.constant 2 : i32
    %11 = arith.muli %arg0, %c2_i32_8 : i32
    %c1_i32 = arith.constant 1 : i32
    %12 = arith.addi %11, %c1_i32 : i32
    %13 = arith.index_cast %12 : i32 to index
    %14 = memref.load %arg1[%13] : memref<4xi32, #tpu.memory_space<smem>>
    %c0_i32_9 = arith.constant 0 : i32
    %15 = arith.cmpi ne, %14, %c0_i32_9 : i32
    %c1 = arith.constant 1 : index
    %c0_10 = arith.constant 0 : index
    %c0_11 = arith.constant 0 : index
    %c0_12 = arith.constant 0 : index
    %16 = vector.load %arg2[%c1, %c0_10, %c0_11, %c0_12] : memref<2x1x16x128xf32, #tpu.memory_space<vmem>>, vector<1x1x16x128xf32>
    %17 = vector.shape_cast %16 : vector<1x1x16x128xf32> to vector<16x128xf32>
    %18 = arith.truncf %17 : vector<16x128xf32> to vector<16x128xbf16>
    %19 = arith.select %15, %0, %18 : vector<16x128xbf16>
    %c16 = arith.constant 16 : index
    %c0_13 = arith.constant 0 : index
    %20 = vector.load %arg9[%c16, %c0_13] : memref<32x128xbf16, #tpu.memory_space<vmem>>, vector<16x128xbf16>
    tpu.vector_store %arg9[%c16, %c0_13], %19 {strides = array<i32>} : memref<32x128xbf16, #tpu.memory_space<vmem>>, vector<16x128xbf16>,
    %c0_14 = arith.constant 0 : index
    %c0_15 = arith.constant 0 : index
    %21 = vector.load %arg9[%c0_14, %c0_15] : memref<32x128xbf16, #tpu.memory_space<vmem>>, vector<32x128xbf16>
    %c0_16 = arith.constant 0 : index
    %c0_17 = arith.constant 0 : index
    %22 = vector.load %arg4[%c0_16, %c0_17] : memref<128x128xbf16, #tpu.memory_space<vmem>>, vector<128x128xbf16>
    %cst = arith.constant dense<0.000000e+00> : vector<32x128xf32>
    %23 = tpu.matmul %21, %22, %cst {dimension_numbers = #tpu.dot_dimension_numbers<[1], [0], [0], [1], [0, 0, 1, 1], [], []>} : vector<32x128xbf16>, vector<128x128xbf16>, vector<32x128xf32> -> vector<32x128xf32>
    %c0_18 = arith.constant 0 : index
    %c0_19 = arith.constant 0 : index
    %24 = vector.load %arg5[%c0_18, %c0_19] : memref<1x128xf32, #tpu.memory_space<vmem>>, vector<1x128xf32>
    %25 = vector.broadcast %24 : vector<1x128xf32> to vector<32x128xf32>
    %26 = arith.addf %23, %25 : vector<32x128xf32>
    %cst_20 = arith.constant 5.000000e-01 : f32
    %27 = vector.broadcast %cst_20 : f32 to vector<32x128xf32>
    %28 = arith.mulf %27, %26 : vector<32x128xf32>
    %cst_21 = arith.constant 4.471500e-02 : f32
    %29 = vector.broadcast %cst_21 : f32 to vector<32x128xf32>
    %30 = arith.mulf %29, %26 : vector<32x128xf32>
    %31 = arith.mulf %30, %26 : vector<32x128xf32>
    %32 = arith.mulf %31, %26 : vector<32x128xf32>
    %33 = arith.addf %26, %32 : vector<32x128xf32>
    %cst_22 = arith.constant 0.797884583 : f32
    %34 = vector.broadcast %cst_22 : f32 to vector<32x128xf32>
    %35 = arith.mulf %34, %33 : vector<32x128xf32>
    %36 = math.tanh %35 : vector<32x128xf32>
    %cst_23 = arith.constant 1.000000e+00 : f32
    %37 = vector.broadcast %cst_23 : f32 to vector<32x128xf32>
    %38 = arith.addf %37, %36 : vector<32x128xf32>
    %39 = arith.mulf %28, %38 : vector<32x128xf32>
    %40 = arith.truncf %39 : vector<32x128xf32> to vector<32x128xbf16>
    %c0_24 = arith.constant 0 : index
    %c0_25 = arith.constant 0 : index
    %41 = vector.load %arg6[%c0_24, %c0_25] : memref<128x128xbf16, #tpu.memory_space<vmem>>, vector<128x128xbf16>
    %cst_26 = arith.constant dense<0.000000e+00> : vector<32x128xf32>
    %42 = tpu.matmul %40, %41, %cst_26 {dimension_numbers = #tpu.dot_dimension_numbers<[1], [0], [0], [1], [0, 0, 1, 1], [], []>} : vector<32x128xbf16>, vector<128x128xbf16>, vector<32x128xf32> -> vector<32x128xf32>
    %c0_27 = arith.constant 0 : index
    %c0_28 = arith.constant 0 : index
    %43 = vector.load %arg7[%c0_27, %c0_28] : memref<1x128xf32, #tpu.memory_space<vmem>>, vector<1x128xf32>
    %44 = vector.broadcast %43 : vector<1x128xf32> to vector<32x128xf32>
    %45 = arith.addf %42, %44 : vector<32x128xf32>
    %46 = vector.shape_cast %45 : vector<32x128xf32> to vector<2x16x128xf32>
    %c0_29 = arith.constant 0 : index
    %c0_30 = arith.constant 0 : index
    %c0_31 = arith.constant 0 : index
    %c0_32 = arith.constant 0 : index
    %47 = vector.load %arg8[%c0_29, %c0_30, %c0_31, %c0_32] : memref<2x1x16x128xf32, #tpu.memory_space<vmem>>, vector<2x1x16x128xf32>
    %48 = vector.shape_cast %47 : vector<2x1x16x128xf32> to vector<2x16x128xf32>
    %49 = vector.shape_cast %46 : vector<2x16x128xf32> to vector<2x1x16x128xf32>
    tpu.vector_store %arg8[%c0_29, %c0_30, %c0_31, %c0_32], %49 {strides = array<i32>} : memref<2x1x16x128xf32, #tpu.memory_space<vmem>>, vector<2x1x16x128xf32>,
    return
  }
  func.func @transform_0(%arg0: i32, %arg1: memref<4xi32, #tpu.memory_space<smem>>) -> (i32, i32, i32, i32) {
    %c0_i32 = arith.constant 0 : i32
    %c0_i32_0 = arith.constant 0 : i32
    %c0_i32_1 = arith.constant 0 : i32
    %c0_i32_2 = arith.constant 0 : i32
    return %arg0, %c0_i32, %c0_i32_0, %c0_i32_1 : i32, i32, i32, i32
  }
  func.func @transform_1(%arg0: i32, %arg1: memref<4xi32, #tpu.memory_space<smem>>) -> (i32, i32) {
    %c0_i32 = arith.constant 0 : i32
    %c0_i32_0 = arith.constant 0 : i32
    %c0_i32_1 = arith.constant 0 : i32
    return %c0_i32, %c0_i32_0 : i32, i32
  }
  func.func @transform_2(%arg0: i32, %arg1: memref<4xi32, #tpu.memory_space<smem>>) -> (i32, i32) {
    %c0_i32 = arith.constant 0 : i32
    %c0_i32_0 = arith.constant 0 : i32
    %c0_i32_1 = arith.constant 0 : i32
    return %c0_i32, %c0_i32_0 : i32, i32
  }
  func.func @transform_3(%arg0: i32, %arg1: memref<4xi32, #tpu.memory_space<smem>>) -> (i32, i32) {
    %c0_i32 = arith.constant 0 : i32
    %c0_i32_0 = arith.constant 0 : i32
    %c0_i32_1 = arith.constant 0 : i32
    return %c0_i32, %c0_i32_0 : i32, i32
  }
  func.func @transform_4(%arg0: i32, %arg1: memref<4xi32, #tpu.memory_space<smem>>) -> (i32, i32) {
    %c0_i32 = arith.constant 0 : i32
    %c0_i32_0 = arith.constant 0 : i32
    %c0_i32_1 = arith.constant 0 : i32
    return %c0_i32, %c0_i32_0 : i32, i32
  }
  func.func @transform_5(%arg0: i32, %arg1: memref<4xi32, #tpu.memory_space<smem>>) -> (i32, i32) {
    %c0_i32 = arith.constant 0 : i32
    %c0_i32_0 = arith.constant 0 : i32
    %c0_i32_1 = arith.constant 0 : i32
    return %c0_i32, %c0_i32_0 : i32, i32
  }
  func.func @transform_6(%arg0: i32, %arg1: memref<4xi32, #tpu.memory_space<smem>>) -> (i32, i32, i32, i32) {
    %c0_i32 = arith.constant 0 : i32
    %c0_i32_0 = arith.constant 0 : i32
    %c0_i32_1 = arith.constant 0 : i32
    %c0_i32_2 = arith.constant 0 : i32
    return %arg0, %c0_i32, %c0_i32_0, %c0_i32_1 : i32, i32, i32, i32
  }
}

</mosaic_0001>

<llo_original>
// kernel: tpu_custom_call.1
$region0: #{tpu_custom_call.1}
  #allocation0 [shape = 'u32[]', space=smem, size = 0x4, offset = 0x4, fixed_abs, tag = 'smem constant byte address 0x4 - core index']
  #allocation1 [shape = 'u32[72,128]{1,0:T(1,128)}', space=vmem, size = 0x9000, scoped, tag = 'internal scratch']
  #allocation2 [shape = 'bf16[32,128]{1,0:T(8,128)(2,1)}', space=vmem, size = 0x2000, scoped, tag = 'scratch operand']
  #allocation3 [shape = 's32[1]{0}', space=sflag, size = 0x4, scoped, tag = 'scoped memory for tpu_custom_call.1']
  #allocation4 [shape = 'u8[512]{0}', space=smem, size = 0x200, scoped, tag = 'prefetched SMEM operand 0']
  %s0 = inlined_call_operand.hbm [shape: s32[4], index: 0, kind: input, shape index: {}]
  %s1 = inlined_call_operand.hbm [shape: f32[4,1,16,128], index: 1, kind: input, shape index: {}]
  %s2 = inlined_call_operand.hbm [shape: bf16[16,128], index: 2, kind: input, shape index: {}]
  %s3 = inlined_call_operand.hbm [shape: bf16[128,128], index: 3, kind: input, shape index: {}]
  %s4 = inlined_call_operand.vmem [shape: f32[1,128], index: 4, kind: input, shape index: {}]
  %s5 = inlined_call_operand.hbm [shape: bf16[128,128], index: 5, kind: input, shape index: {}]
  %s6 = inlined_call_operand.vmem [shape: f32[1,128], index: 6, kind: input, shape index: {}]
  %s7 = inlined_call_operand.hbm [shape: f32[4,1,16,128], index: 7, kind: output, shape index: {}]
  %s8 = sld [smem:[#allocation0]]
  $region73: #{tpu_custom_call.1} parent=0
    _
  %s10 = ssub.s32 1, %s8
  %s11 = scalar_select 0, %s10, %s8
  %s13 = sshll.u32 %s0, 4
  %s14 = int_to_ptr.hbm [resolvable:$true] %s13
  %16 = dma.hbm_to_smem %s14, 16, [#allocation4], [#allocation3]
  %18 = dma.done [#allocation3], 16
  %19 = sfence
  $region1: #{tpu_custom_call.1} parent=0
    #allocation5 [shape = 'u8[32768]{0}', space=vmem, size = 0x8000, scoped, tag = 'input window, operand 1']
    #allocation6 [shape = 's32[2]{0}', space=sflag, size = 0x8, scoped, tag = 'scoped memory for tpu_custom_call.1']
    #allocation7 [shape = 's32[2]{0}', space=sflag, size = 0x8, scoped, tag = 'scoped memory for tpu_custom_call.1']
    #allocation8 [shape = 'u8[4096]{0}', space=vmem, size = 0x1000, scoped, tag = 'input window, operand 2, single buffered']
    #allocation9 [shape = 's32[1]{0}', space=sflag, size = 0x4, scoped, tag = 'scoped memory for tpu_custom_call.1']
    #allocation10 [shape = 'u8[32768]{0}', space=vmem, size = 0x8000, scoped, tag = 'input window, operand 3, single buffered']
    #allocation11 [shape = 'u8[32768]{0}', space=vmem, size = 0x8000, scoped, tag = 'input window, operand 5, single buffered']
    #allocation12 [shape = 's32[1]{0}', space=sflag, size = 0x4, scoped, tag = 'scoped memory for tpu_custom_call.1']
    #allocation13 [shape = 'u8[32768]{0}', space=vmem, size = 0x8000, scoped, tag = 'output window, operand 0']
    %20 = vsyncpa [#allocation6], 0
    %s21 = scalar_lea.sflag [#allocation6], 1
    %22 = vsyncpa %s21, 0
    %23 = vsyncpa [#allocation9], 0
    %24 = vsyncpa [#allocation12], 0
    %25 = vsyncpa [#allocation7], 0
    %s26 = scalar_lea.sflag [#allocation7], 1
    %27 = vsyncpa %s26, 0
    loop: start=0, step=1, limit=4
    $region2: #{tpu_custom_call.1} parent=1 // loop_pre_header
      _
    $region3: #{tpu_custom_call.1} parent=1 // loop_header
      %s29 = sphi 0, %s33
      %p30 = scmp.ge.s32.totalorder %s29, 4
      %s39 = sphi 0, %s41
      %s42 = sphi 0, %s39
      %s43 = sphi 0, %s42
      %s59 = sphi 0, %s43
      %s63 = sphi 0, %s63
      %s65 = sphi 0, %s63
      %s66 = sphi 0, %s65
      %s80 = sphi 0, %s66
      %s84 = sphi 0, %s84
      %s86 = sphi 0, %s84
      %s87 = sphi 0, %s86
      %s101 = sphi 0, %s87
      %s105 = sphi 0, %s105
      %s107 = sphi 0, %s105
      %s108 = sphi 0, %s107
      %s122 = sphi 0, %s108
      %s126 = sphi 0, %s126
      %s128 = sphi 0, %s126
      %s129 = sphi 0, %s128
      %s143 = sphi 0, %s129
      %s147 = sphi 0, %s147
      %s149 = sphi 0, %s147
      %s150 = sphi 0, %s149
      %s164 = sphi 0, %s150
      %s170 = sphi 0, %s172
      %s173 = sphi 0, %s170
      %s174 = sphi 0, %s173
      %s190 = sphi 0, %s174
    $region4: #{tpu_custom_call.1} parent=1 // loop_header_branch
      %32 = sbr.rel (%p30) target = $region8
    $region5: #{tpu_custom_call.1} parent=1 // loop_body
      %s34 = ssub.s32 %s29, 1
      %s35 = ssub.s32 %s29, 2
      %s36 = sadd.s32 %s29, 1
      %s37 = ssub.s32 %s29, %s36
      %p38 = scmp.eq.s32.totalorder %s37, 0
      %s40 = sadd.s32 %s39, 1
      %s41 = scalar_select %p38, %s39, %s40
      %p44 = pneg %p38
      %p45 = scmp.eq.s32.totalorder %s29, 1
      %p46 = por %p44, %p45
      %p47 = scmp.ne.s32.totalorder %s39, %s42
      %p48 = scmp.eq.s32.totalorder %s29, 0
      %p49 = por %p47, %p48
      %p50 = scmp.ne.s32.totalorder %s39, %s42
      %p51 = scmp.eq.s32.totalorder %s34, 1
      %p52 = por %p50, %p51
      %p53 = scmp.ne.s32.totalorder %s42, %s43
      %p54 = scmp.eq.s32.totalorder %s34, 0
      %p55 = por %p53, %p54
      %p56 = scmp.ne.s32.totalorder %s42, %s43
      %p57 = scmp.eq.s32.totalorder %s35, 1
      %p58 = por %p56, %p57
      %p60 = scmp.ne.s32.totalorder %s43, %s59
      %p61 = scmp.eq.s32.totalorder %s35, 0
      %p62 = por %p60, %p61
      %s64 = sadd.s32 %s63, 1
      %p67 = scmp.eq.s32.totalorder %s29, 1
      %p68 = scmp.ne.s32.totalorder %s63, %s65
      %p69 = scmp.eq.s32.totalorder %s29, 0
      %p70 = por %p68, %p69
      %p71 = scmp.ne.s32.totalorder %s63, %s65
      %p72 = scmp.eq.s32.totalorder %s34, 1
      %p73 = por %p71, %p72
      %p74 = scmp.ne.s32.totalorder %s65, %s66
      %p75 = scmp.eq.s32.totalorder %s34, 0
      %p76 = por %p74, %p75
      %p77 = scmp.ne.s32.totalorder %s65, %s66
      %p78 = scmp.eq.s32.totalorder %s35, 1
      %p79 = por %p77, %p78
      %p81 = scmp.ne.s32.totalorder %s66, %s80
      %p82 = scmp.eq.s32.totalorder %s35, 0
      %p83 = por %p81, %p82
      %s85 = sadd.s32 %s84, 1
      %p88 = scmp.eq.s32.totalorder %s29, 1
      %p89 = scmp.ne.s32.totalorder %s84, %s86
      %p90 = scmp.eq.s32.totalorder %s29, 0
      %p91 = por %p89, %p90
      %p92 = scmp.ne.s32.totalorder %s84, %s86
      %p93 = scmp.eq.s32.totalorder %s34, 1
      %p94 = por %p92, %p93
      %p95 = scmp.ne.s32.totalorder %s86, %s87
      %p96 = scmp.eq.s32.totalorder %s34, 0
      %p97 = por %p95, %p96
      %p98 = scmp.ne.s32.totalorder %s86, %s87
      %p99 = scmp.eq.s32.totalorder %s35, 1
      %p100 = por %p98, %p99
      %p102 = scmp.ne.s32.totalorder %s87, %s101
      %p103 = scmp.eq.s32.totalorder %s35, 0
      %p104 = por %p102, %p103
      %s106 = sadd.s32 %s105, 1
      %p109 = scmp.eq.s32.totalorder %s29, 1
      %p110 = scmp.ne.s32.totalorder %s105, %s107
      %p111 = scmp.eq.s32.totalorder %s29, 0
      %p112 = por %p110, %p111
      %p113 = scmp.ne.s32.totalorder %s105, %s107
      %p114 = scmp.eq.s32.totalorder %s34, 1
      %p115 = por %p113, %p114
      %p116 = scmp.ne.s32.totalorder %s107, %s108
      %p117 = scmp.eq.s32.totalorder %s34, 0
      %p118 = por %p116, %p117
      %p119 = scmp.ne.s32.totalorder %s107, %s108
      %p120 = scmp.eq.s32.totalorder %s35, 1
      %p121 = por %p119, %p120
      %p123 = scmp.ne.s32.totalorder %s108, %s122
      %p124 = scmp.eq.s32.totalorder %s35, 0
      %p125 = por %p123, %p124
      %s127 = sadd.s32 %s126, 1
      %p130 = scmp.eq.s32.totalorder %s29, 1
      %p131 = scmp.ne.s32.totalorder %s126, %s128
      %p132 = scmp.eq.s32.totalorder %s29, 0
      %p133 = por %p131, %p132
      %p134 = scmp.ne.s32.totalorder %s126, %s128
      %p135 = scmp.eq.s32.totalorder %s34, 1
      %p136 = por %p134, %p135
      %p137 = scmp.ne.s32.totalorder %s128, %s129
      %p138 = scmp.eq.s32.totalorder %s34, 0
      %p139 = por %p137, %p138
      %p140 = scmp.ne.s32.totalorder %s128, %s129
      %p141 = scmp.eq.s32.totalorder %s35, 1
      %p142 = por %p140, %p141
      %p144 = scmp.ne.s32.totalorder %s129, %s143
      %p145 = scmp.eq.s32.totalorder %s35, 0
      %p146 = por %p144, %p145
      %s148 = sadd.s32 %s147, 1
      %p151 = scmp.eq.s32.totalorder %s29, 1
      %p152 = scmp.ne.s32.totalorder %s147, %s149
      %p153 = scmp.eq.s32.totalorder %s29, 0
      %p154 = por %p152, %p153
      %p155 = scmp.ne.s32.totalorder %s147, %s149
      %p156 = scmp.eq.s32.totalorder %s34, 1
      %p157 = por %p155, %p156
      %p158 = scmp.ne.s32.totalorder %s149, %s150
      %p159 = scmp.eq.s32.totalorder %s34, 0
      %p160 = por %p158, %p159
      %p161 = scmp.ne.s32.totalorder %s149, %s150
      %p162 = scmp.eq.s32.totalorder %s35, 1
      %p163 = por %p161, %p162
      %p165 = scmp.ne.s32.totalorder %s150, %s164
      %p166 = scmp.eq.s32.totalorder %s35, 0
      %p167 = por %p165, %p166
      %s168 = ssub.s32 %s29, %s36
      %p169 = scmp.eq.s32.totalorder %s168, 0
      %s171 = sadd.s32 %s170, 1
      %s172 = scalar_select %p169, %s170, %s171
      %p175 = pneg %p169
      %p176 = scmp.eq.s32.totalorder %s29, 1
      %p177 = por %p175, %p176
      %p178 = scmp.ne.s32.totalorder %s170, %s173
      %p179 = scmp.eq.s32.totalorder %s29, 0
      %p180 = por %p178, %p179
      %p181 = scmp.ne.s32.totalorder %s170, %s173
      %p182 = scmp.eq.s32.totalorder %s34, 1
      %p183 = por %p181, %p182
      %p184 = scmp.ne.s32.totalorder %s173, %s174
      %p185 = scmp.eq.s32.totalorder %s34, 0
      %p186 = por %p184, %p185
      %p187 = scmp.ne.s32.totalorder %s173, %s174
      %p188 = scmp.eq.s32.totalorder %s35, 1
      %p189 = por %p187, %p188
      %p191 = scmp.ne.s32.totalorder %s174, %s190
      %p192 = scmp.eq.s32.totalorder %s35, 0
      %p193 = por %p191, %p192
      %p194 = scmp.le.s32.totalorder 1, %s29
      %p195 = scmp.lt.s32.totalorder %s29, 3
      %p196 = pnand %p194, %p195
      %p197 = pneg %p196
      // Predicated region
      $region9: #{tpu_custom_call.1} parent=5 // pred_check
        _
      $region10: #{tpu_custom_call.1} parent=5 // pred_check_branch
        %199 = sbr.rel (%p196) target = $region12
      $region11: #{tpu_custom_call.1} parent=5 // pred_region
        %s200 = ssub.s32 %s29, 1
        // Predicated region
        $region13: #{tpu_custom_call.1} parent=11 // pred_check
          %p201 = pneg %p76
        $region14: #{tpu_custom_call.1} parent=11 // pred_check_branch
          %203 = sbr.rel (%p201) target = $region16
        $region15: #{tpu_custom_call.1} parent=11 // pred_region
          %205 = vsyncadd [#allocation9], 0
          %s206 = sshll.u32 %s2, 4
          %s207 = int_to_ptr.hbm [resolvable:$true] %s206
          %s208 = sshll.u32 [#allocation8], 4
          %s209 = int_to_ptr.vmem [resolvable:$true] %s208
          %214 = dma.hbm_to_vmem [thread:$0]  %s207, 128, %s209, [#allocation9], 64, 64, 4
        $region16: #{tpu_custom_call.1} parent=11 // pred_fallthru
          _
        // Predicated region
        $region17: #{tpu_custom_call.1} parent=11 // pred_check
          %p215 = pneg %p97
        $region18: #{tpu_custom_call.1} parent=11 // pred_check_branch
          %217 = sbr.rel (%p215) target = $region20
        $region19: #{tpu_custom_call.1} parent=11 // pred_region
          %219 = vsyncadd [#allocation9], 0
          %s220 = sshll.u32 %s3, 4
          %s221 = int_to_ptr.hbm [resolvable:$true] %s220
          %s222 = sshll.u32 [#allocation10], 4
          %s223 = int_to_ptr.vmem [resolvable:$true] %s222
          %228 = dma.hbm_to_vmem [thread:$0]  %s221, 1024, %s223, [#allocation9], 64, 64, 4
        $region20: #{tpu_custom_call.1} parent=11 // pred_fallthru
          _
        // Predicated region
        $region21: #{tpu_custom_call.1} parent=11 // pred_check
          %p229 = pneg %p118
        $region22: #{tpu_custom_call.1} parent=11 // pred_check_branch
          %231 = sbr.rel (%p229) target = $region24
        $region23: #{tpu_custom_call.1} parent=11 // pred_region
          _
        $region24: #{tpu_custom_call.1} parent=11 // pred_fallthru
          _
        // Predicated region
        $region25: #{tpu_custom_call.1} parent=11 // pred_check
          %p232 = pneg %p139
        $region26: #{tpu_custom_call.1} parent=11 // pred_check_branch
          %234 = sbr.rel (%p232) target = $region28
        $region27: #{tpu_custom_call.1} parent=11 // pred_region
          %236 = vsyncadd [#allocation12], 0
          %s237 = sshll.u32 %s5, 4
          %s238 = int_to_ptr.hbm [resolvable:$true] %s237
          %s239 = sshll.u32 [#allocation11], 4
          %s240 = int_to_ptr.vmem [resolvable:$true] %s239
          %245 = dma.hbm_to_vmem [thread:$0]  %s238, 1024, %s240, [#allocation12], 64, 64, 4
        $region28: #{tpu_custom_call.1} parent=11 // pred_fallthru
          _
        // Predicated region
        $region29: #{tpu_custom_call.1} parent=11 // pred_check
          %p246 = pneg %p160
        $region30: #{tpu_custom_call.1} parent=11 // pred_check_branch
          %248 = sbr.rel (%p246) target = $region32
        $region31: #{tpu_custom_call.1} parent=11 // pred_region
          _
        $region32: #{tpu_custom_call.1} parent=11 // pred_fallthru
          _
      $region12: #{tpu_custom_call.1} parent=5 // pred_fallthru
        _
      %p249 = scmp.lt.s32.totalorder %s29, 2
      // Predicated region
      $region33: #{tpu_custom_call.1} parent=5 // pred_check
        %p250 = pneg %p249
      $region34: #{tpu_custom_call.1} parent=5 // pred_check_branch
        %252 = sbr.rel (%p250) target = $region36
      $region35: #{tpu_custom_call.1} parent=5 // pred_region
        // Predicated region
        $region37: #{tpu_custom_call.1} parent=35 // pred_check
          %p253 = pneg %p49
        $region38: #{tpu_custom_call.1} parent=35 // pred_check_branch
          %255 = sbr.rel (%p253) target = $region40
        $region39: #{tpu_custom_call.1} parent=35 // pred_region
          %s256 = sand.u32 %s39, 1
          %s257 = scalar_lea.sflag [#allocation6], %s256
          %s258 = sand.u32 %s39, 1
          %s259 = smul.addr %s258, 32
          %s260 = scalar_lea.vmem [#allocation5], %s259
          %s261 = smul.u32 2, %s29
          %263 = vsyncadd %s257, 0
          %s264 = smul.addr %s261, 2
          %s265 = smul.addr %s264, 8
          %s266 = scalar_lea.hbm %s1, %s265
          %s267 = sshll.u32 %s266, 4
          %s268 = int_to_ptr.hbm [resolvable:$true] %s267
          %s269 = sshll.u32 %s260, 4
          %s270 = int_to_ptr.vmem [resolvable:$true] %s269
          %275 = dma.hbm_to_vmem [thread:$0]  %s268, 512, %s270, %s257, 128, 128, 8
        $region40: #{tpu_custom_call.1} parent=35 // pred_fallthru
          _
      $region36: #{tpu_custom_call.1} parent=5 // pred_fallthru
        _
      %p276 = scmp.le.s32.totalorder 1, %s29
      %p277 = scmp.lt.s32.totalorder %s29, 3
      %p278 = pnand %p276, %p277
      %p279 = pneg %p278
      // Predicated region
      $region41: #{tpu_custom_call.1} parent=5 // pred_check
        _
      $region42: #{tpu_custom_call.1} parent=5 // pred_check_branch
        %281 = sbr.rel (%p278) target = $region44
      $region43: #{tpu_custom_call.1} parent=5 // pred_region
        %s282 = ssub.s32 %s29, 1
        %s283 = sand.u32 %s42, 1
        %s284 = scalar_lea.sflag [#allocation6], %s283
        %s285 = sand.u32 %s42, 1
        %s286 = smul.addr %s285, 32
        %s287 = scalar_lea.vmem [#allocation5], %s286
        // Predicated region
        $region45: #{tpu_custom_call.1} parent=43 // pred_check
          %p288 = pneg %p55
        $region46: #{tpu_custom_call.1} parent=43 // pred_check_branch
          %290 = sbr.rel (%p288) target = $region48
        $region47: #{tpu_custom_call.1} parent=43 // pred_region
          %292 = dma.done %s284, 512
        $region48: #{tpu_custom_call.1} parent=43 // pred_fallthru
          _
        // Predicated region
        $region49: #{tpu_custom_call.1} parent=43 // pred_check
          %p293 = pneg %p76
        $region50: #{tpu_custom_call.1} parent=43 // pred_check_branch
          %295 = sbr.rel (%p293) target = $region52
        $region51: #{tpu_custom_call.1} parent=43 // pred_region
          %297 = dma.done [#allocation9], 128
        $region52: #{tpu_custom_call.1} parent=43 // pred_fallthru
          _
        // Predicated region
        $region53: #{tpu_custom_call.1} parent=43 // pred_check
          %p298 = pneg %p97
        $region54: #{tpu_custom_call.1} parent=43 // pred_check_branch
          %300 = sbr.rel (%p298) target = $region56
        $region55: #{tpu_custom_call.1} parent=43 // pred_region
          %302 = dma.done [#allocation9], 1024
        $region56: #{tpu_custom_call.1} parent=43 // pred_fallthru
          _
        // Predicated region
        $region57: #{tpu_custom_call.1} parent=43 // pred_check
          %p303 = pneg %p139
        $region58: #{tpu_custom_call.1} parent=43 // pred_check_branch
          %305 = sbr.rel (%p303) target = $region60
        $region59: #{tpu_custom_call.1} parent=43 // pred_region
          %307 = dma.done [#allocation12], 1024
        $region60: #{tpu_custom_call.1} parent=43 // pred_fallthru
          _
        %s308 = sand.u32 %s42, 1
        %s309 = scalar_lea.sflag [#allocation6], %s308
        %s310 = sand.u32 %s42, 1
        %s311 = smul.addr %s310, 32
        %s312 = scalar_lea.vmem [#allocation5], %s311
        %p313 = pneg %p55
        %p314 = pneg %p52
        %p315 = pneg %p76
        %p316 = pneg %p73
        %p317 = pneg %p97
        %p318 = pneg %p94
        %p319 = pneg %p118
        %p320 = pneg %p115
        %p321 = pneg %p139
        %p322 = pneg %p136
        %p323 = pneg %p160
        %p324 = pneg %p157
        %p325 = pneg %p186
        %p326 = pneg %p183
        %s327 = sand.u32 %s173, 1
        %s328 = scalar_lea.sflag [#allocation7], %s327
        %s329 = sand.u32 %s173, 1
        %s330 = smul.addr %s329, 32
        %s331 = scalar_lea.vmem [#allocation13], %s330
        %s332 = smul.u32 2, %s34
        %s333 = smul.u32 2, %s34
        %v334 = vld [vmem:[#allocation8] sm:$0xf]
        %v335 = vld [vmem:[#allocation8 + $0x4] sm:$0xf]
        %s336 = smul.u32 %s34, 2
        %s337 = sld [smem:[#allocation4 + %s336]]
        %p338 = scmp.ne.s32.totalorder %s337, 0
        %v339 = vld [vmem:[%s287] sm:$0xff]
        %v340 = vld [vmem:[%s287 + $0x8] sm:$0xff]
        %v341 = vpack.c.bf16 %v339, %v339
        %v342 = vpack.c.bf16 %v340, %v340
        %s343 = scalar_select %p338, 1, 0
        %v344 = vstv %s343
        %vm345 = vcmp.eq.s32.totalorder %v344, 1
        %v346 = vsel %vm345, %v334, %v341
        %v347 = vsel %vm345, %v335, %v342
        %348 = vst [vmem:[#allocation2] sm:$0xf] %v346
        %349 = vst [vmem:[#allocation2 + $0x4] sm:$0xf] %v347
        %s350 = sadd.s32 %s336, 1
        %s351 = sld [smem:[#allocation4 + %s350]]
        %p352 = scmp.ne.s32.totalorder %s351, 0
        %s353 = scalar_lea.vmem %s287, 16 [#allocation5]
        %v354 = vld [vmem:[%s353] sm:$0xff]
        %v355 = vld [vmem:[%s353 + $0x8] sm:$0xff]
        %v356 = vpack.c.bf16 %v354, %v354
        %v357 = vpack.c.bf16 %v355, %v355
        %s358 = scalar_select %p352, 1, 0
        %v359 = vstv %s358
        %vm360 = vcmp.eq.s32.totalorder %v359, 1
        %v361 = vsel %vm360, %v334, %v356
        %v362 = vsel %vm360, %v335, %v357
        %363 = vst [vmem:[#allocation2 + $0x8] sm:$0xf] %v361
        %364 = vst [vmem:[#allocation2 + $0xc] sm:$0xf] %v362
        %v365 = vld [vmem:[#allocation2] sm:$0xf]
        %v366 = vld [vmem:[#allocation2 + $0x4] sm:$0xf]
        %v367 = vld [vmem:[#allocation2 + $0x8] sm:$0xf]
        %v368 = vld [vmem:[#allocation2 + $0xc] sm:$0xf]
        %v369 = vld [vmem:[#allocation10] sm:$0xf]
        %v370 = vld [vmem:[#allocation10 + $0x4] sm:$0xf]
        %v371 = vld [vmem:[#allocation10 + $0x8] sm:$0xf]
        %v372 = vld [vmem:[#allocation10 + $0xc] sm:$0xf]
        %v373 = vld [vmem:[#allocation10 + $0x10] sm:$0xf]
        %v374 = vld [vmem:[#allocation10 + $0x14] sm:$0xf]
        %v375 = vld [vmem:[#allocation10 + $0x18] sm:$0xf]
        %v376 = vld [vmem:[#allocation10 + $0x1c] sm:$0xf]
        %v377 = vld [vmem:[#allocation10 + $0x20] sm:$0xf]
        %v378 = vld [vmem:[#allocation10 + $0x24] sm:$0xf]
        %v379 = vld [vmem:[#allocation10 + $0x28] sm:$0xf]
        %v380 = vld [vmem:[#allocation10 + $0x2c] sm:$0xf]
        %v381 = vld [vmem:[#allocation10 + $0x30] sm:$0xf]
        %v382 = vld [vmem:[#allocation10 + $0x34] sm:$0xf]
        %v383 = vld [vmem:[#allocation10 + $0x38] sm:$0xf]
        %v384 = vld [vmem:[#allocation10 + $0x3c] sm:$0xf]
        %v385 = vld [vmem:[%s4] sm:$0x1]
        %v387 = vperm.slane %v385, 0
        %v393 = vunpack.c.l.b16 %v365
        %v394 = vunpack.c.l.b16 %v366
        %v395 = vunpack.c.l.b16 %v367
        %v396 = vunpack.c.l.b16 %v368
        %v397 = vpack.c.b16 %v394, %v393
        %v398 = vpack.c.b16 %v396, %v395
        %v417 = vunpack.c.l.b16 %v369
        %v418 = vunpack.c.l.b16 %v370
        %v419 = vunpack.c.l.b16 %v371
        %v420 = vunpack.c.l.b16 %v372
        %v421 = vunpack.c.l.b16 %v373
        %v422 = vunpack.c.l.b16 %v374
        %v423 = vunpack.c.l.b16 %v375
        %v424 = vunpack.c.l.b16 %v376
        %v425 = vunpack.c.l.b16 %v377
        %v426 = vunpack.c.l.b16 %v378
        %v427 = vunpack.c.l.b16 %v379
        %v428 = vunpack.c.l.b16 %v380
        %v429 = vunpack.c.l.b16 %v381
        %v430 = vunpack.c.l.b16 %v382
        %v431 = vunpack.c.l.b16 %v383
        %v432 = vunpack.c.l.b16 %v384
        %v433 = vpack.c.b16 %v418, %v417
        %v434 = vpack.c.b16 %v420, %v419
        %v435 = vpack.c.b16 %v422, %v421
        %v436 = vpack.c.b16 %v424, %v423
        %v437 = vpack.c.b16 %v426, %v425
        %v438 = vpack.c.b16 %v428, %v427
        %v439 = vpack.c.b16 %v430, %v429
        %v440 = vpack.c.b16 %v432, %v431
        %449 = vmatpush.bf16.msra.mxu0 %v440
        %450 = vmatpush.bf16.msra.mxu0 %v439
        %451 = vmatpush.bf16.msra.mxu0 %v438
        %452 = vmatpush.bf16.msra.mxu0 %v437
        %453 = vmatpush.bf16.msra.mxu0 %v436
        %454 = vmatpush.bf16.msra.mxu0 %v435
        %455 = vmatpush.bf16.msra.mxu0 %v434
        %456 = vmatpush.bf16.msra.mxu0 %v433
        %457 = vmatmul.bf16.gmra.mxu0 %v397
        %v458 = vpop.f32.mrf.mxu0
        %v459 = vadd.f32 %v387, %v458
        %v460 = vpop.f32.mrf.mxu0
        %v461 = vadd.f32 %v387, %v460
        %462 = vmatmul.bf16.gmra.mxu0 %v398
        %v463 = vpop.f32.mrf.mxu0
        %v464 = vadd.f32 %v387, %v463
        %v465 = vpop.f32.mrf.mxu0
        %v466 = vadd.f32 %v387, %v465
        %467 = vdwg.mxu0
        %v468 = vmul.f32 %v459, 0.5
        %v469 = vmul.f32 %v461, 0.5
        %v470 = vmul.f32 %v464, 0.5
        %v471 = vmul.f32 %v466, 0.5
        %v472 = vmul.f32 %v459, 0.044715
        %v473 = vmul.f32 %v461, 0.044715
        %v474 = vmul.f32 %v464, 0.044715
        %v475 = vmul.f32 %v466, 0.044715
        %v476 = vmul.f32 %v472, %v459
        %v477 = vmul.f32 %v473, %v461
        %v478 = vmul.f32 %v474, %v464
        %v479 = vmul.f32 %v475, %v466
        %v480 = vmul.f32 %v476, %v459
        %v481 = vmul.f32 %v477, %v461
        %v482 = vmul.f32 %v478, %v464
        %v483 = vmul.f32 %v479, %v466
        %v484 = vadd.f32 %v459, %v480
        %v485 = vadd.f32 %v461, %v481
        %v486 = vadd.f32 %v464, %v482
        %v487 = vadd.f32 %v466, %v483
        %v488 = vmul.f32 %v484, 0.7978846
        %v489 = vmul.f32 %v485, 0.7978846
        %v490 = vmul.f32 %v486, 0.7978846
        %v491 = vmul.f32 %v487, 0.7978846
        %v492 = vtanh.pop %v488
        %v493 = vtanh.pop %v489
        %v494 = vtanh.pop %v490
        %v495 = vtanh.pop %v491
        %v496 = vadd.f32 %v492, 1.0
        %v497 = vadd.f32 %v493, 1.0
        %v498 = vadd.f32 %v494, 1.0
        %v499 = vadd.f32 %v495, 1.0
        %v500 = vmul.f32 %v468, %v496
        %v501 = vmul.f32 %v469, %v497
        %v502 = vmul.f32 %v470, %v498
        %v503 = vmul.f32 %v471, %v499
        %v504 = vpack.c.bf16 %v501, %v500
        %v505 = vpack.c.bf16 %v503, %v502
        %v506 = vld [vmem:[#allocation11] sm:$0xf]
        %v507 = vld [vmem:[#allocation11 + $0x4] sm:$0xf]
        %v508 = vld [vmem:[#allocation11 + $0x8] sm:$0xf]
        %v509 = vld [vmem:[#allocation11 + $0xc] sm:$0xf]
        %v510 = vld [vmem:[#allocation11 + $0x10] sm:$0xf]
        %v511 = vld [vmem:[#allocation11 + $0x14] sm:$0xf]
        %v512 = vld [vmem:[#allocation11 + $0x18] sm:$0xf]
        %v513 = vld [vmem:[#allocation11 + $0x1c] sm:$0xf]
        %v514 = vld [vmem:[#allocation11 + $0x20] sm:$0xf]
        %v515 = vld [vmem:[#allocation11 + $0x24] sm:$0xf]
        %v516 = vld [vmem:[#allocation11 + $0x28] sm:$0xf]
        %v517 = vld [vmem:[#allocation11 + $0x2c] sm:$0xf]
        %v518 = vld [vmem:[#allocation11 + $0x30] sm:$0xf]
        %v519 = vld [vmem:[#allocation11 + $0x34] sm:$0xf]
        %v520 = vld [vmem:[#allocation11 + $0x38] sm:$0xf]
        %v521 = vld [vmem:[#allocation11 + $0x3c] sm:$0xf]
        %v522 = vld [vmem:[%s6] sm:$0x1]
        %v524 = vperm.slane %v522, 0
        %v542 = vunpack.c.l.b16 %v506
        %v543 = vunpack.c.l.b16 %v507
        %v544 = vunpack.c.l.b16 %v508
        %v545 = vunpack.c.l.b16 %v509
        %v546 = vunpack.c.l.b16 %v510
        %v547 = vunpack.c.l.b16 %v511
        %v548 = vunpack.c.l.b16 %v512
        %v549 = vunpack.c.l.b16 %v513
        %v550 = vunpack.c.l.b16 %v514
        %v551 = vunpack.c.l.b16 %v515
        %v552 = vunpack.c.l.b16 %v516
        %v553 = vunpack.c.l.b16 %v517
        %v554 = vunpack.c.l.b16 %v518
        %v555 = vunpack.c.l.b16 %v519
        %v556 = vunpack.c.l.b16 %v520
        %v557 = vunpack.c.l.b16 %v521
        %v558 = vpack.c.b16 %v543, %v542
        %v559 = vpack.c.b16 %v545, %v544
        %v560 = vpack.c.b16 %v547, %v546
        %v561 = vpack.c.b16 %v549, %v548
        %v562 = vpack.c.b16 %v551, %v550
        %v563 = vpack.c.b16 %v553, %v552
        %v564 = vpack.c.b16 %v555, %v554
        %v565 = vpack.c.b16 %v557, %v556
        %574 = vmatpush.bf16.msra.mxu0 %v565
        %575 = vmatpush.bf16.msra.mxu0 %v564
        %576 = vmatpush.bf16.msra.mxu0 %v563
        %577 = vmatpush.bf16.msra.mxu0 %v562
        %578 = vmatpush.bf16.msra.mxu0 %v561
        %579 = vmatpush.bf16.msra.mxu0 %v560
        %580 = vmatpush.bf16.msra.mxu0 %v559
        %581 = vmatpush.bf16.msra.mxu0 %v558
        %582 = vmatmul.bf16.gmra.mxu0 %v504
        %v583 = vpop.f32.mrf.mxu0
        %v584 = vadd.f32 %v524, %v583
        %v585 = vpop.f32.mrf.mxu0
        %v586 = vadd.f32 %v524, %v585
        %587 = vmatmul.bf16.gmra.mxu0 %v505
        %v588 = vpop.f32.mrf.mxu0
        %v589 = vadd.f32 %v524, %v588
        %v590 = vpop.f32.mrf.mxu0
        %v591 = vadd.f32 %v524, %v590
        %592 = vdwg.mxu0
        %593 = vst [vmem:[%s331] sm:$0xff] %v584
        %594 = vst [vmem:[%s331 + $0x8] sm:$0xff] %v586
        %595 = vst [vmem:[%s331 + $0x10] sm:$0xff] %v589
        %596 = vst [vmem:[%s331 + $0x18] sm:$0xff] %v591
        %s597 = sand.u32 %s173, 1
        %s598 = scalar_lea.sflag [#allocation7], %s597
        %s599 = sand.u32 %s173, 1
        %s600 = smul.addr %s599, 32
        %s601 = scalar_lea.vmem [#allocation13], %s600
        // Predicated region
        $region61: #{tpu_custom_call.1} parent=43 // pred_check
          %p602 = pneg %p183
        $region62: #{tpu_custom_call.1} parent=43 // pred_check_branch
          %604 = sbr.rel (%p602) target = $region64
        $region63: #{tpu_custom_call.1} parent=43 // pred_region
          %s605 = smul.u32 2, %s34
          %607 = vsyncadd %s598, 0
          %s608 = smul.addr %s605, 2
          %s609 = smul.addr %s608, 8
          %s610 = scalar_lea.hbm %s7, %s609
          %s611 = sshll.u32 %s601, 4
          %s612 = int_to_ptr.vmem [resolvable:$true] %s611
          %s613 = sshll.u32 %s610, 4
          %s614 = int_to_ptr.hbm [resolvable:$true] %s613
          %619 = dma.vmem_to_hbm [thread:$0]  %s612, 512, %s614, %s598, 128, 128, 8
        $region64: #{tpu_custom_call.1} parent=43 // pred_fallthru
          _
      $region44: #{tpu_custom_call.1} parent=5 // pred_fallthru
        _
      %p620 = scmp.le.s32.totalorder 2, %s29
      // Predicated region
      $region65: #{tpu_custom_call.1} parent=5 // pred_check
        %p621 = pneg %p620
      $region66: #{tpu_custom_call.1} parent=5 // pred_check_branch
        %623 = sbr.rel (%p621) target = $region68
      $region67: #{tpu_custom_call.1} parent=5 // pred_region
        %s624 = ssub.s32 %s29, 2
        // Predicated region
        $region69: #{tpu_custom_call.1} parent=67 // pred_check
          %p625 = pneg %p189
        $region70: #{tpu_custom_call.1} parent=67 // pred_check_branch
          %627 = sbr.rel (%p625) target = $region72
        $region71: #{tpu_custom_call.1} parent=67 // pred_region
          %s628 = sand.u32 %s174, 1
          %s629 = scalar_lea.sflag [#allocation7], %s628
          %s630 = sand.u32 %s174, 1
          %s631 = smul.addr %s630, 32
          %s632 = scalar_lea.vmem [#allocation13], %s631
          %634 = dma.done %s629, 512
        $region72: #{tpu_custom_call.1} parent=67 // pred_fallthru
          _
      $region68: #{tpu_custom_call.1} parent=5 // pred_fallthru
        _
    $region6: #{tpu_custom_call.1} parent=1 // loop_footer
      %s33 = sadd.s32 1, %s29
    $region7: #{tpu_custom_call.1} parent=1 // loop_footer_branch
      %28 = sbr.rel target = $region3
    $region8: #{tpu_custom_call.1} parent=1 // loop_exit
      _
    %635 = vsyncpa [#allocation6], 1
    %s636 = scalar_lea.sflag [#allocation6], 1
    %637 = vsyncpa %s636, 1
    %638 = vsyncpa [#allocation9], 1
    %639 = vsyncpa [#allocation12], 1
    %640 = vsyncpa [#allocation7], 1
    %s641 = scalar_lea.sflag [#allocation7], 1
    %642 = vsyncpa %s641, 1

</llo_original>
